<compile_context>
chip_gen: v6e
topology: v6e:2x2x1
jax: 0.10.0
libtpu: 0.0.40
codegen_flags: <defaults>
</compile_context>

<pallas_src>
import jax
import jax.numpy as jnp
from jax.experimental import pallas as pl
from jax.experimental.pallas import tpu as pltpu

LANE = 128     # TPU lane width; hidden-ish dims are zero-padded to this
SUBLANE = 8    # f32 sublane granularity


def _round_up(n, m):
    return (n + m - 1) // m * m


# ---------------------------------------------------------------------------
# Elementwise helpers
# ---------------------------------------------------------------------------
def _softplus(x):
    # torch.nn.functional.softplus (beta=1, threshold=20); pack-time/ref only.
    return jnp.where(x > 20.0, x, jnp.log1p(jnp.exp(jnp.minimum(x, 20.0))))


def _mish(x):
    # pack-time / reference only (no longer evaluated in the kernel)
    return x * jnp.tanh(_softplus(x))


def _silu_kernel(x):
    # silu(x) = x*sigmoid(x) = 0.5*x*(1 + tanh(x/2)): one EUP pass.
    return 0.5 * x * (1.0 + jnp.tanh(0.5 * x))


def _silu_ref(x):
    return x / (1.0 + jnp.exp(-x))


# ---------------------------------------------------------------------------
# One-time parameter packing (hoisted out of the per-call path)
# ---------------------------------------------------------------------------
def pack_ep_theta_params(params, *, x_dim, p_dim, hidden, t_dim, T):
    """Fold the whole time-MLP into a per-timestep table and lay every weight
    out as a single lane-dense (R, 128) slab with 8-aligned static row
    offsets.  Zero padding is exact: padded lanes stay 0 through SiLU and
    every matmul."""
    f32 = jnp.float32
    H, H2 = hidden, 2 * hidden
    a_cols = 1 + x_dim + p_dim                 # fused activation: [t-1 | x | p]
    # TODO(synk): generalize to hidden > 64 / (1+x_dim+p_dim) > 128 by tiling
    # the 128-lane column blocks; current scheme assumes they fit in one.
    assert H2 <= LANE and x_dim <= LANE and a_cols <= LANE

    mm = lambda a, b: jnp.dot(a, b, precision=jax.lax.Precision.HIGHEST)

    # --- TimeEmbedding buffer (exactly the module's precomputed table) ------
    steps = jnp.arange(T, dtype=f32)[:, None]                       # s = t - 1
    dims = jnp.arange(t_dim, dtype=f32)[None, :]
    tab = steps * 10.0 ** (dims * 4.0 / t_dim)
    emb = jnp.concatenate([jnp.sin(tab), jnp.cos(tab)], axis=1)     # (T, 2*t_dim)
    # --- time_mlp + fc1's dstep branch + b1, folded per timestep ------------
    h = _mish(mm(emb, params["wt1"]) + params["bt1"])               # (T, 2H)
    dstep = mm(h, params["wt2"]) + params["bt2"]                    # (T, H)
    z_tab = mm(dstep, params["w1t"]) + params["b1"]                 # (T, H)

    a_rows = _round_up(a_cols, SUBLANE)
    t_pad = _round_up(T, SUBLANE)

    # fc1 weight over the fused activation; row 0 (the t-1 lane) stays zero.
    w1a = jnp.zeros((a_rows, H), f32)
    w1a = w1a.at[1:1 + x_dim].set(params["w1x"].astype(f32))
    w1a = w1a.at[1 + x_dim:a_cols].set(params["w1p"].astype(f32))

    def pad(a, rows):
        out = jnp.zeros((rows, LANE), f32)
        return out.at[:a.shape[0], :a.shape[1]].set(a.astype(f32))

    layout = (
        ("w1a", w1a,          a_rows),    # fc1 over [t-1 | x | p]
        ("tab", z_tab,        t_pad),     # dstep(t) @ W1t + b1, per timestep
        ("w2",  params["w2"], LANE),      # fc2    (K padded hidden   -> 128)
        ("w3",  params["w3"], LANE),      # fcLast (K padded 2*hidden -> 128)
        ("b2",  params["b2"], SUBLANE),   # row 0 used
        ("b3",  params["b3"], SUBLANE),   # row 0 used
    )
    offs, segs, row = {}, [], 0
    for name, mat, rows in layout:
        offs[name] = row
        segs.append(pad(mat, rows))
        row += rows
    W = jnp.concatenate(segs, axis=0)             # (R, 128), R % 8 == 0

    return {"W": W, "offs": offs, "x_dim": x_dim, "p_dim": p_dim,
            "hidden": hidden, "t_dim": t_dim, "T": T,
            "a_cols": a_cols, "a_rows": a_rows, "t_pad": t_pad}


# ---------------------------------------------------------------------------
# Kernel
# ---------------------------------------------------------------------------
def _build_kernel(offs, a_rows, t_pad, out_cols):
    o_w1a, o_tab = offs["w1a"], offs["tab"]
    o_w2, o_w3, o_b2, o_b3 = offs["w2"], offs["w3"], offs["b2"], offs["b3"]
    f32 = jnp.float32

    def kernel(a_ref, w_ref, out_ref):
        a = a_ref[...]                                     # (bt, A): [t-1|x|p|0..]
        bt = a.shape[0]
        # Time-MLP is a pack-time table; the lookup is a one-hot matmul.
        # one-hot: broadcasted_iota + compare -> pure VALU; matmul -> idle MXU.
        t_idx = a[:, 0:1].astype(jnp.int32)                # exact: small ints in f32
        ids = jax.lax.broadcasted_iota(jnp.int32, (bt, t_pad), 1)
        onehot = (ids == t_idx).astype(f32)                # (bt, t_pad)
        # fc1([x|p|dstep]) == a@W1a (t-1 lane hits a zero row) + table[t-1]
        z = (jnp.dot(a, w_ref[o_w1a:o_w1a + a_rows, :], preferred_element_type=f32)
             + jnp.dot(onehot, w_ref[o_tab:o_tab + t_pad, :], preferred_element_type=f32))
        z = _silu_kernel(z)
        z2 = _silu_kernel(
            jnp.dot(z, w_ref[o_w2:o_w2 + LANE, :], preferred_element_type=f32)
            + w_ref[o_b2:o_b2 + 1, :])
        out = (jnp.dot(z2, w_ref[o_w3:o_w3 + LANE, :], preferred_element_type=f32)
               + w_ref[o_b3:o_b3 + 1, :])
        # Narrow (x_dim-wide) store: masked vst, hidden under the EUP work.
        out_ref[...] = out[:, :out_cols] if out_cols < LANE else out

    return kernel


# ---------------------------------------------------------------------------
# Wrapper
# ---------------------------------------------------------------------------
def _plan_batch(B, *, cap=512, min_tile=128, target_steps=8):
    """Pick (batch_tile, padded_B).  Tiles are multiples of 8, capped at `cap`
    rows (v5e 16 MiB scoped-VMEM safe) and sized for >= `target_steps` grid
    steps on large batches (keeps both v7x TensorCores busy and intra-core
    double-buffering alive).  B is always padded, never a ragged single tile."""
    B8 = _round_up(max(B, 1), SUBLANE)
    if B8 <= cap:
        return B8, B8
    bt = min(cap, max(min_tile, _round_up(pl.cdiv(B8, target_steps), SUBLANE)))
    return bt, _round_up(B8, bt)


def ep_theta_forward(x, p, t, packed, *, batch_tile=None):
    """Eval-mode forward of ep_theta (use_positional_encoding=True).
    `packed` comes from pack_ep_theta_params (one-time, per model)."""
    B, x_dim = x.shape
    assert x_dim == packed["x_dim"] and p.shape[1] == packed["p_dim"]
    a_cols, a_rows, t_pad = packed["a_cols"], packed["a_rows"], packed["t_pad"]

    if batch_tile is None:
        bt, B_pad = _plan_batch(B)
    else:
        assert batch_tile % SUBLANE == 0, "batch_tile must be a multiple of 8"
        bt, B_pad = batch_tile, _round_up(B, batch_tile)

    # Fused activation [t-1 | x | p], zero-padded rows (batch) and cols (to A).
    # Padded rows read table row 0 and yield finite garbage that is sliced off.
    t_m1 = t.reshape(-1, 1).astype(jnp.float32) - 1.0
    a = jnp.concatenate([t_m1, x.astype(jnp.float32), p.astype(jnp.float32)], axis=1)
    a = jnp.pad(a, ((0, B_pad - B), (0, a_rows - a_cols)))

    W = packed["W"]
    kernel = _build_kernel(packed["offs"], a_rows, t_pad, x_dim)

    out = pl.pallas_call(
        kernel,
        out_shape=jax.ShapeDtypeStruct((B_pad, x_dim), jnp.float32),
        grid=(B_pad // bt,),
        in_specs=[
            pl.BlockSpec((bt, a_rows), lambda i: (i, 0)),   # fused activations
            pl.BlockSpec(W.shape, lambda i: (0, 0)),        # resident weight slab
        ],
        out_specs=pl.BlockSpec((bt, x_dim), lambda i: (i, 0)),
        compiler_params=pltpu.CompilerParams(
            dimension_semantics=("parallel",)),
    )(a, W)

    return out[:B] if B_pad != B else out


# ---------------------------------------------------------------------------
# Pure-JAX reference (module semantics) for the correctness check
# ---------------------------------------------------------------------------
def ep_theta_reference(x, p, t, params, *, t_dim, T):
    mm = lambda a, b: jnp.dot(a, b, precision=jax.lax.Precision.HIGHEST)
    f32 = jnp.float32
    steps = jnp.arange(T, dtype=f32)[:, None]
    dims = jnp.arange(t_dim, dtype=f32)[None, :]
    tab = steps * 10.0 ** (dims * 4.0 / t_dim)
    emb_table = jnp.concatenate([jnp.sin(tab), jnp.cos(tab)], axis=1)   # buffer
    emb = emb_table[t.reshape(-1).astype(jnp.int32) - 1]                # embedding[t-1]
    h = _mish(mm(emb, params["wt1"]) + params["bt1"])
    dstep = mm(h, params["wt2"]) + params["bt2"]
    xpt = jnp.concatenate([x, p, dstep], axis=1)
    w1 = jnp.concatenate([params["w1x"], params["w1p"], params["w1t"]], axis=0)
    z = _silu_ref(mm(xpt, w1) + params["b1"])
    z2 = _silu_ref(mm(z, params["w2"]) + params["b2"])
    return mm(z2, params["w3"]) + params["b3"]


# ---------------------------------------------------------------------------
# Deterministic parameter init (synthetic; shapes match ep_theta.__init__)
# ---------------------------------------------------------------------------
def init_params(key, x_dim, p_dim, hidden, t_dim):
    ks = jax.random.split(key, 12)
    scale = 0.1

    def w(k, shape):
        return (scale * jax.random.normal(k, shape)).astype(jnp.float32)

    return {
        # TimeEmbedding.time_mlp
        "wt1": w(ks[0], (2 * t_dim, 2 * hidden)),
        "bt1": w(ks[1], (1, 2 * hidden)),
        "wt2": w(ks[2], (2 * hidden, hidden)),
        "bt2": w(ks[3], (1, hidden)),
        # fc1 split along its input-concat axis: [x | p | diffusion_step]
        "w1x": w(ks[4], (x_dim, hidden)),
        "w1p": w(ks[5], (p_dim, hidden)),
        "w1t": w(ks[6], (hidden, hidden)),
        "b1":  w(ks[7], (1, hidden)),
        # fc2, fcLast
        "w2": w(ks[8], (hidden, 2 * hidden)),
        "b2": w(ks[9], (1, 2 * hidden)),
        "w3": w(ks[10], (2 * hidden, x_dim)),
        "b3": w(ks[11], (1, x_dim)),
    }


if __name__ == "__main__":
    # Small shapes consistent with the module's forward
    B, x_dim, p_dim, hidden, t_dim, T = 8, 4, 4, 32, 16, 50

    key = jax.random.PRNGKey(0)
    kx, kp, kt, kw, kx2, kp2, kt2 = jax.random.split(key, 7)

    params = init_params(kw, x_dim, p_dim, hidden, t_dim)
    packed = pack_ep_theta_params(params, x_dim=x_dim, p_dim=p_dim,
                                  hidden=hidden, t_dim=t_dim, T=T)   # once per model

    # --- small-shape correctness check -------------------------------------
    x = jax.random.normal(kx, (B, x_dim), dtype=jnp.float32)
    p = jax.random.normal(kp, (B, p_dim), dtype=jnp.float32)
    t = jax.random.randint(kt, (B, 1), 1, T + 1, dtype=jnp.int32)    # t in [1, T]

    out = jax.block_until_ready(ep_theta_forward(x, p, t, packed))
    ref = ep_theta_reference(x, p, t, params, t_dim=t_dim, T=T)
    assert out.shape == (B, x_dim) and out.dtype == jnp.float32
    # The time embedding is now a shared precomputed table, so the residual
    # error is only f32 matmul pass / summation-order differences (~1e-6 typ).
    assert jnp.allclose(out, ref, rtol=1e-3, atol=1e-3), "mismatch vs reference"

    # --- ragged larger batch: exercises batch padding + multi-step grid ----
    B2 = 523
    x2 = jax.random.normal(kx2, (B2, x_dim), dtype=jnp.float32)
    p2 = jax.random.normal(kp2, (B2, p_dim), dtype=jnp.float32)
    t2 = jax.random.randint(kt2, (B2, 1), 1, T + 1, dtype=jnp.int32)
    out2 = jax.block_until_ready(ep_theta_forward(x2, p2, t2, packed))
    ref2 = ep_theta_reference(x2, p2, t2, params, t_dim=t_dim, T=T)
    assert out2.shape == (B2, x_dim)
    assert jnp.allclose(out2, ref2, rtol=1e-3, atol=1e-3), "mismatch (ragged batch)"

    print("KERNEL_OK")
</pallas_src>

<mosaic_0001>
module attributes {stable_mosaic.version = 11 : i64} {
  func.func @kernel(%arg0: i32, %arg1: memref<8x16xf32, #tpu.memory_space<vmem>>, %arg2: memref<344x128xf32, #tpu.memory_space<vmem>>, %arg3: memref<8x4xf32, #tpu.memory_space<vmem>>) attributes {dimension_semantics = [#tpu.dimension_semantics<parallel>], iteration_bounds = array<i64: 1>, scalar_prefetch = 0 : i64, scratch_operands = 0 : i64, tpu.core_type = #tpu.core_type<tc>, window_params = [{transform_indices = @transform_0, window_bounds = array<i64: 8, 16>}, {pipeline_mode = #tpu.pipeline_mode<synchronous>, transform_indices = @transform_1, window_bounds = array<i64: 344, 128>}, {transform_indices = @transform_2, window_bounds = array<i64: 8, 4>}]} {
    %c0 = arith.constant 0 : index
    %c0_0 = arith.constant 0 : index
    %0 = vector.load %arg1[%c0, %c0_0] : memref<8x16xf32, #tpu.memory_space<vmem>>, vector<8x16xf32>
    %1 = vector.extract_strided_slice %0 {offsets = [0, 0], sizes = [8, 1], strides = [1, 1]} : vector<8x16xf32> to vector<8x1xf32>
    %2 = arith.fptosi %1 : vector<8x1xf32> to vector<8x1xi32>
    %3 = tpu.iota {dimensions = array<i32: 1>} : vector<8x56xi32>
    %4 = vector.broadcast %2 : vector<8x1xi32> to vector<8x56xi32>
    %5 = arith.cmpi eq, %3, %4 : vector<8x56xi32>
    %6 = arith.extui %5 : vector<8x56xi1> to vector<8x56xi32>
    %7 = arith.sitofp %6 : vector<8x56xi32> to vector<8x56xf32>
    %c0_1 = arith.constant 0 : index
    %c0_2 = arith.constant 0 : index
    %8 = vector.load %arg2[%c0_1, %c0_2] : memref<344x128xf32, #tpu.memory_space<vmem>>, vector<16x128xf32>
    %cst = arith.constant dense<0.000000e+00> : vector<8x128xf32>
    %9 = tpu.matmul %0, %8, %cst {dimension_numbers = #tpu.dot_dimension_numbers<[1], [0], [0], [1], [0, 0, 1, 1], [], []>} : vector<8x16xf32>, vector<16x128xf32>, vector<8x128xf32> -> vector<8x128xf32>
    %c16 = arith.constant 16 : index
    %c0_3 = arith.constant 0 : index
    %10 = vector.load %arg2[%c16, %c0_3] : memref<344x128xf32, #tpu.memory_space<vmem>>, vector<56x128xf32>
    %cst_4 = arith.constant dense<0.000000e+00> : vector<8x128xf32>
    %11 = tpu.matmul %7, %10, %cst_4 {dimension_numbers = #tpu.dot_dimension_numbers<[1], [0], [0], [1], [0, 0, 1, 1], [], []>} : vector<8x56xf32>, vector<56x128xf32>, vector<8x128xf32> -> vector<8x128xf32>
    %12 = arith.addf %9, %11 : vector<8x128xf32>
    %cst_5 = arith.constant 5.000000e-01 : f32
    %13 = vector.broadcast %cst_5 : f32 to vector<8x128xf32>
    %14 = arith.mulf %13, %12 : vector<8x128xf32>
    %cst_6 = arith.constant 5.000000e-01 : f32
    %15 = vector.broadcast %cst_6 : f32 to vector<8x128xf32>
    %16 = arith.mulf %15, %12 : vector<8x128xf32>
    %17 = math.tanh %16 : vector<8x128xf32>
    %cst_7 = arith.constant 1.000000e+00 : f32
    %18 = vector.broadcast %cst_7 : f32 to vector<8x128xf32>
    %19 = arith.addf %18, %17 : vector<8x128xf32>
    %20 = arith.mulf %14, %19 : vector<8x128xf32>
    %c72 = arith.constant 72 : index
    %c0_8 = arith.constant 0 : index
    %21 = vector.load %arg2[%c72, %c0_8] : memref<344x128xf32, #tpu.memory_space<vmem>>, vector<128x128xf32>
    %cst_9 = arith.constant dense<0.000000e+00> : vector<8x128xf32>
    %22 = tpu.matmul %20, %21, %cst_9 {dimension_numbers = #tpu.dot_dimension_numbers<[1], [0], [0], [1], [0, 0, 1, 1], [], []>} : vector<8x128xf32>, vector<128x128xf32>, vector<8x128xf32> -> vector<8x128xf32>
    %c328 = arith.constant 328 : index
    %c0_10 = arith.constant 0 : index
    %23 = vector.load %arg2[%c328, %c0_10] : memref<344x128xf32, #tpu.memory_space<vmem>>, vector<1x128xf32>
    %24 = vector.broadcast %23 : vector<1x128xf32> to vector<8x128xf32>
    %25 = arith.addf %22, %24 : vector<8x128xf32>
    %cst_11 = arith.constant 5.000000e-01 : f32
    %26 = vector.broadcast %cst_11 : f32 to vector<8x128xf32>
    %27 = arith.mulf %26, %25 : vector<8x128xf32>
    %cst_12 = arith.constant 5.000000e-01 : f32
    %28 = vector.broadcast %cst_12 : f32 to vector<8x128xf32>
    %29 = arith.mulf %28, %25 : vector<8x128xf32>
    %30 = math.tanh %29 : vector<8x128xf32>
    %cst_13 = arith.constant 1.000000e+00 : f32
    %31 = vector.broadcast %cst_13 : f32 to vector<8x128xf32>
    %32 = arith.addf %31, %30 : vector<8x128xf32>
    %33 = arith.mulf %27, %32 : vector<8x128xf32>
    %c200 = arith.constant 200 : index
    %c0_14 = arith.constant 0 : index
    %34 = vector.load %arg2[%c200, %c0_14] : memref<344x128xf32, #tpu.memory_space<vmem>>, vector<128x128xf32>
    %cst_15 = arith.constant dense<0.000000e+00> : vector<8x128xf32>
    %35 = tpu.matmul %33, %34, %cst_15 {dimension_numbers = #tpu.dot_dimension_numbers<[1], [0], [0], [1], [0, 0, 1, 1], [], []>} : vector<8x128xf32>, vector<128x128xf32>, vector<8x128xf32> -> vector<8x128xf32>
    %c336 = arith.constant 336 : index
    %c0_16 = arith.constant 0 : index
    %36 = vector.load %arg2[%c336, %c0_16] : memref<344x128xf32, #tpu.memory_space<vmem>>, vector<1x128xf32>
    %37 = vector.broadcast %36 : vector<1x128xf32> to vector<8x128xf32>
    %38 = arith.addf %35, %37 : vector<8x128xf32>
    %39 = vector.extract_strided_slice %38 {offsets = [0, 0], sizes = [8, 4], strides = [1, 1]} : vector<8x128xf32> to vector<8x4xf32>
    %c0_17 = arith.constant 0 : index
    %c0_18 = arith.constant 0 : index
    %40 = vector.load %arg3[%c0_17, %c0_18] : memref<8x4xf32, #tpu.memory_space<vmem>>, vector<8x4xf32>
    tpu.vector_store %arg3[%c0_17, %c0_18], %39 {strides = array<i32>} : memref<8x4xf32, #tpu.memory_space<vmem>>, vector<8x4xf32>,
    return
  }
  func.func @transform_0(%arg0: i32) -> (i32, i32) {
    %c0_i32 = arith.constant 0 : i32
    %c0_i32_0 = arith.constant 0 : i32
    return %arg0, %c0_i32 : i32, i32
  }
  func.func @transform_1(%arg0: i32) -> (i32, i32) {
    %c0_i32 = arith.constant 0 : i32
    %c0_i32_0 = arith.constant 0 : i32
    %c0_i32_1 = arith.constant 0 : i32
    return %c0_i32, %c0_i32_0 : i32, i32
  }
  func.func @transform_2(%arg0: i32) -> (i32, i32) {
    %c0_i32 = arith.constant 0 : i32
    %c0_i32_0 = arith.constant 0 : i32
    return %arg0, %c0_i32 : i32, i32
  }
}

</mosaic_0001>

<llo_original>
// kernel: tpu_custom_call.1
$region0: #{tpu_custom_call.1}
  #allocation0 [shape = 'u32[]', space=smem, size = 0x4, offset = 0x4, fixed_abs, tag = 'smem constant byte address 0x4 - core index']
  #allocation1 [shape = 'u32[144,128]{1,0:T(1,128)}', space=vmem, size = 0x12000, scoped, tag = 'internal scratch']
  %s0 = inlined_call_operand.hbm [shape: f32[8,16], index: 0, kind: input, shape index: {}]
  %s1 = inlined_call_operand.hbm [shape: f32[344,128], index: 1, kind: input, shape index: {}]
  %s2 = inlined_call_operand.vmem [shape: f32[8,4], index: 2, kind: output, shape index: {}]
  %s3 = sld [smem:[#allocation0]]
  $region26: #{tpu_custom_call.1} parent=0
    _
  %s5 = ssub.s32 1, %s3
  %s6 = scalar_select 0, %s5, %s3
  $region1: #{tpu_custom_call.1} parent=0
    #allocation2 [shape = 'u8[4096]{0}', space=vmem, size = 0x1000, scoped, tag = 'input window, operand 0, single buffered']
    #allocation3 [shape = 's32[1]{0}', space=sflag, size = 0x4, scoped, tag = 'scoped memory for tpu_custom_call.1']
    #allocation4 [shape = 'u8[176128]{0}', space=vmem, size = 0x2b000, scoped, tag = 'input window, operand 1, single buffered']
    #allocation5 [shape = 's32[1]{0}', space=sflag, size = 0x4, scoped, tag = 'scoped memory for tpu_custom_call.1']
    %7 = vsyncpa [#allocation3], 0
    %8 = vsyncpa [#allocation5], 0
    // Predicated region
    $region2: #{tpu_custom_call.1} parent=1 // pred_check
      _
    $region3: #{tpu_custom_call.1} parent=1 // pred_check_branch
      %10 = sbr.rel (0) target = $region5
    $region4: #{tpu_custom_call.1} parent=1 // pred_region
      %s12 = ssub.s32 128, 128
      %13 = vsyncadd [#allocation3], %s12
      %s15 = sshll.u32 [#allocation2], 4
      %s16 = int_to_ptr.vmem [resolvable:$true] %s15
      %18 = dma.hbm_to_vmem [thread:$0]  %s0, 128, %s16, [#allocation3]
    $region5: #{tpu_custom_call.1} parent=1 // pred_fallthru
      _
    // Predicated region
    $region6: #{tpu_custom_call.1} parent=1 // pred_check
      _
    $region7: #{tpu_custom_call.1} parent=1 // pred_check_branch
      %20 = sbr.rel (0) target = $region9
    $region8: #{tpu_custom_call.1} parent=1 // pred_region
      %s22 = ssub.s32 5504, 5504
      %23 = vsyncadd [#allocation5], %s22
      %s24 = sshll.u32 [#allocation4], 4
      %s25 = int_to_ptr.vmem [resolvable:$true] %s24
      %30 = dma.hbm_to_vmem [thread:$0]  %s1, 5504, %s25, [#allocation5], 128, 128, 8
    $region9: #{tpu_custom_call.1} parent=1 // pred_fallthru
      _
    // Predicated region
    $region10: #{tpu_custom_call.1} parent=1 // pred_check
      _
    $region11: #{tpu_custom_call.1} parent=1 // pred_check_branch
      %32 = sbr.rel (0) target = $region13
    $region12: #{tpu_custom_call.1} parent=1 // pred_region
      %33 = dma.done [#allocation3], 128
    $region13: #{tpu_custom_call.1} parent=1 // pred_fallthru
      _
    // Predicated region
    $region14: #{tpu_custom_call.1} parent=1 // pred_check
      _
    $region15: #{tpu_custom_call.1} parent=1 // pred_check_branch
      %35 = sbr.rel (0) target = $region17
    $region16: #{tpu_custom_call.1} parent=1 // pred_region
      %36 = dma.done [#allocation5], 5504
    $region17: #{tpu_custom_call.1} parent=1 // pred_fallthru
      _
    %v37 = vld [vmem:[#allocation2] sm:$0xff]
    %v38 = vcvt.f32.s32.to.zero.pseudo %v37
    %v39 = vlaneseq
    %v40 = vand.u32 %v39, 127
    %41 = vset.pattern.permute.xlu0 0
    %42 = vperm.xlu0 %41, %v38
    %v43 = vpop.permute.xlu0 %42
    %vm44 = vcmp.eq.s32.totalorder %v40, %v43
    %v45 = vsel %vm44, 1, 0
    %v46 = vcvt.s32.f32 %v45
    %v47 = vld [vmem:[#allocation4] sm:$0xff]
    %v48 = vld [vmem:[#allocation4 + $0x8] sm:$0xff]
    %v49 = vld [vmem:[#allocation4 + $0x10] sm:$0xff]
    %v50 = vld [vmem:[#allocation4 + $0x18] sm:$0xff]
    %v51 = vld [vmem:[#allocation4 + $0x20] sm:$0xff]
    %v52 = vld [vmem:[#allocation4 + $0x28] sm:$0xff]
    %v53 = vld [vmem:[#allocation4 + $0x30] sm:$0xff]
    %v54 = vld [vmem:[#allocation4 + $0x38] sm:$0xff]
    %v55 = vld [vmem:[#allocation4 + $0x40] sm:$0xff]
    %vm56 = vcmask 457728
    %v58 = vsel %vm56, %v46, 0
    %60 = vmatprep.subr.mxu0 0.0
    %61 = vmatpush1.msra.mxu0 0.0
    %62 = vmatprep.subr.mxu0 0.0
    %63 = vmatpush1.msra.mxu0 0.0
    %64 = vmatprep.subr.mxu0 0.0
    %65 = vmatpush1.msra.mxu0 0.0
    %66 = vmatprep.subr.mxu0 0.0
    %67 = vmatpush1.msra.mxu0 0.0
    %68 = vmatprep.subr.mxu0 0.0
    %69 = vmatpush1.msra.mxu0 0.0
    %70 = vmatprep.subr.mxu0 0.0
    %71 = vmatpush1.msra.mxu0 0.0
    %72 = vmatprep.subr.mxu0 0.0
    %73 = vmatpush1.msra.mxu0 0.0
    %74 = vmatprep.subr.mxu0 0.0
    %75 = vmatpush1.msra.mxu0 0.0
    %76 = vmatprep.subr.mxu0 0.0
    %77 = vmatpush1.msra.mxu0 0.0
    %78 = vmatprep.subr.mxu0 0.0
    %79 = vmatpush1.msra.mxu0 %v55
    %80 = vmatprep.subr.mxu0 0.0
    %81 = vmatpush1.msra.mxu0 %v54
    %82 = vmatprep.subr.mxu0 0.0
    %83 = vmatpush1.msra.mxu0 %v53
    %84 = vmatprep.subr.mxu0 0.0
    %85 = vmatpush1.msra.mxu0 %v52
    %86 = vmatprep.subr.mxu0 0.0
    %87 = vmatpush1.msra.mxu0 %v51
    %88 = vmatprep.subr.mxu0 0.0
    %89 = vmatpush1.msra.mxu0 %v50
    %90 = vmatprep.subr.mxu0 0.0
    %91 = vmatpush1.msra.mxu0 %v49
    %92 = vmatprep.subr.mxu0 0.0
    %93 = vmatpush2.msra.mxu0 0.0
    %94 = vmatprep.subr.mxu0 0.0
    %95 = vmatpush2.msra.mxu0 0.0
    %96 = vmatprep.subr.mxu0 0.0
    %97 = vmatpush2.msra.mxu0 0.0
    %98 = vmatprep.subr.mxu0 0.0
    %99 = vmatpush2.msra.mxu0 0.0
    %100 = vmatprep.subr.mxu0 0.0
    %101 = vmatpush2.msra.mxu0 0.0
    %102 = vmatprep.subr.mxu0 0.0
    %103 = vmatpush2.msra.mxu0 0.0
    %104 = vmatprep.subr.mxu0 0.0
    %105 = vmatpush2.msra.mxu0 0.0
    %106 = vmatprep.subr.mxu0 0.0
    %107 = vmatpush2.msra.mxu0 0.0
    %108 = vmatprep.subr.mxu0 0.0
    %109 = vmatpush2.msra.mxu0 0.0
    %110 = vmatprep.subr.mxu0 0.0
    %111 = vmatpush2.msra.mxu0 0.0
    %112 = vmatprep.subr.mxu0 0.0
    %113 = vmatpush2.msra.mxu0 0.0
    %114 = vmatprep.subr.mxu0 0.0
    %115 = vmatpush2.msra.mxu0 0.0
    %116 = vmatprep.subr.mxu0 0.0
    %117 = vmatpush2.msra.mxu0 0.0
    %118 = vmatprep.subr.mxu0 0.0
    %119 = vmatpush2.msra.mxu0 0.0
    %120 = vmatprep.subr.mxu0 0.0
    %121 = vmatpush2.msra.mxu0 0.0
    %122 = vmatprep.subr.mxu0 0.0
    %123 = vmatpush2.msra.mxu0 0.0
    %124 = vmatprep.mubr.f32.mxu0 0.0
    %125 = vmatmul.mubr.f32.gmra.mxu0 %v58
    %v126 = vpop.f32.mrf.mxu0
    %v127 = vadd.f32 0.0, %v126
    %v128 = vpop.f32.mrf.mxu0
    %129 = vdwg.mxu0
    %vm130 = vcmask 130048
    %v132 = vsel %vm130, %v37, 0
    %134 = vmatprep.subr.mxu0 0.0
    %135 = vmatpush1.msra.mxu0 0.0
    %136 = vmatprep.subr.mxu0 0.0
    %137 = vmatpush1.msra.mxu0 0.0
    %138 = vmatprep.subr.mxu0 0.0
    %139 = vmatpush1.msra.mxu0 0.0
    %140 = vmatprep.subr.mxu0 0.0
    %141 = vmatpush1.msra.mxu0 0.0
    %142 = vmatprep.subr.mxu0 0.0
    %143 = vmatpush1.msra.mxu0 0.0
    %144 = vmatprep.subr.mxu0 0.0
    %145 = vmatpush1.msra.mxu0 0.0
    %146 = vmatprep.subr.mxu0 0.0
    %147 = vmatpush1.msra.mxu0 0.0
    %148 = vmatprep.subr.mxu0 0.0
    %149 = vmatpush1.msra.mxu0 0.0
    %150 = vmatprep.subr.mxu0 0.0
    %151 = vmatpush1.msra.mxu0 0.0
    %152 = vmatprep.subr.mxu0 0.0
    %153 = vmatpush1.msra.mxu0 0.0
    %154 = vmatprep.subr.mxu0 0.0
    %155 = vmatpush1.msra.mxu0 0.0
    %156 = vmatprep.subr.mxu0 0.0
    %157 = vmatpush1.msra.mxu0 0.0
    %158 = vmatprep.subr.mxu0 0.0
    %159 = vmatpush1.msra.mxu0 0.0
    %160 = vmatprep.subr.mxu0 0.0
    %161 = vmatpush1.msra.mxu0 0.0
    %162 = vmatprep.subr.mxu0 0.0
    %163 = vmatpush1.msra.mxu0 %v48
    %164 = vmatprep.subr.mxu0 0.0
    %165 = vmatpush1.msra.mxu0 %v47
    %166 = vmatprep.subr.mxu0 0.0
    %167 = vmatpush2.msra.mxu0 0.0
    %168 = vmatprep.subr.mxu0 0.0
    %169 = vmatpush2.msra.mxu0 0.0
    %170 = vmatprep.subr.mxu0 0.0
    %171 = vmatpush2.msra.mxu0 0.0
    %172 = vmatprep.subr.mxu0 0.0
    %173 = vmatpush2.msra.mxu0 0.0
    %174 = vmatprep.subr.mxu0 0.0
    %175 = vmatpush2.msra.mxu0 0.0
    %176 = vmatprep.subr.mxu0 0.0
    %177 = vmatpush2.msra.mxu0 0.0
    %178 = vmatprep.subr.mxu0 0.0
    %179 = vmatpush2.msra.mxu0 0.0
    %180 = vmatprep.subr.mxu0 0.0
    %181 = vmatpush2.msra.mxu0 0.0
    %182 = vmatprep.subr.mxu0 0.0
    %183 = vmatpush2.msra.mxu0 0.0
    %184 = vmatprep.subr.mxu0 0.0
    %185 = vmatpush2.msra.mxu0 0.0
    %186 = vmatprep.subr.mxu0 0.0
    %187 = vmatpush2.msra.mxu0 0.0
    %188 = vmatprep.subr.mxu0 0.0
    %189 = vmatpush2.msra.mxu0 0.0
    %190 = vmatprep.subr.mxu0 0.0
    %191 = vmatpush2.msra.mxu0 0.0
    %192 = vmatprep.subr.mxu0 0.0
    %193 = vmatpush2.msra.mxu0 0.0
    %194 = vmatprep.subr.mxu0 0.0
    %195 = vmatpush2.msra.mxu0 0.0
    %196 = vmatprep.subr.mxu0 0.0
    %197 = vmatpush2.msra.mxu0 0.0
    %198 = vmatprep.mubr.f32.mxu0 0.0
    %199 = vmatmul.mubr.f32.gmra.mxu0 %v132
    %v200 = vpop.f32.mrf.mxu0
    %v201 = vadd.f32 %v127, %v200
    %v202 = vpop.f32.mrf.mxu0
    %203 = vdwg.mxu0
    %v204 = vmul.f32 %v201, 0.5
    %v205 = vtanh.pop %v204
    %v206 = vadd.f32 %v205, 1.0
    %v207 = vmul.f32 %v204, %v206
    %v208 = vld [vmem:[#allocation4 + $0x48] sm:$0xff]
    %v209 = vld [vmem:[#allocation4 + $0x50] sm:$0xff]
    %v210 = vld [vmem:[#allocation4 + $0x58] sm:$0xff]
    %v211 = vld [vmem:[#allocation4 + $0x60] sm:$0xff]
    %v212 = vld [vmem:[#allocation4 + $0x68] sm:$0xff]
    %v213 = vld [vmem:[#allocation4 + $0x70] sm:$0xff]
    %v214 = vld [vmem:[#allocation4 + $0x78] sm:$0xff]
    %v215 = vld [vmem:[#allocation4 + $0x80] sm:$0xff]
    %v216 = vld [vmem:[#allocation4 + $0x88] sm:$0xff]
    %v217 = vld [vmem:[#allocation4 + $0x90] sm:$0xff]
    %v218 = vld [vmem:[#allocation4 + $0x98] sm:$0xff]
    %v219 = vld [vmem:[#allocation4 + $0xa0] sm:$0xff]
    %v220 = vld [vmem:[#allocation4 + $0xa8] sm:$0xff]
    %v221 = vld [vmem:[#allocation4 + $0xb0] sm:$0xff]
    %v222 = vld [vmem:[#allocation4 + $0xb8] sm:$0xff]
    %v223 = vld [vmem:[#allocation4 + $0xc0] sm:$0xff]
    %v224 = vld [vmem:[#allocation4 + $0x148] sm:$0x1]
    %v225 = vlaneseq
    %v226 = vshrl.u32 %v225, 7
    %v227 = vsub.s32 0, %v226
    %v228 = vrot.slane %v224, %v227
    %229 = vmatprep.subr.mxu0 0.0
    %230 = vmatpush1.msra.mxu0 %v223
    %231 = vmatprep.subr.mxu0 0.0
    %232 = vmatpush1.msra.mxu0 %v222
    %233 = vmatprep.subr.mxu0 0.0
    %234 = vmatpush1.msra.mxu0 %v221
    %235 = vmatprep.subr.mxu0 0.0
    %236 = vmatpush1.msra.mxu0 %v220
    %237 = vmatprep.subr.mxu0 0.0
    %238 = vmatpush1.msra.mxu0 %v219
    %239 = vmatprep.subr.mxu0 0.0
    %240 = vmatpush1.msra.mxu0 %v218
    %241 = vmatprep.subr.mxu0 0.0
    %242 = vmatpush1.msra.mxu0 %v217
    %243 = vmatprep.subr.mxu0 0.0
    %244 = vmatpush1.msra.mxu0 %v216
    %245 = vmatprep.subr.mxu0 0.0
    %246 = vmatpush1.msra.mxu0 %v215
    %247 = vmatprep.subr.mxu0 0.0
    %248 = vmatpush1.msra.mxu0 %v214
    %249 = vmatprep.subr.mxu0 0.0
    %250 = vmatpush1.msra.mxu0 %v213
    %251 = vmatprep.subr.mxu0 0.0
    %252 = vmatpush1.msra.mxu0 %v212
    %253 = vmatprep.subr.mxu0 0.0
    %254 = vmatpush1.msra.mxu0 %v211
    %255 = vmatprep.subr.mxu0 0.0
    %256 = vmatpush1.msra.mxu0 %v210
    %257 = vmatprep.subr.mxu0 0.0
    %258 = vmatpush1.msra.mxu0 %v209
    %259 = vmatprep.subr.mxu0 0.0
    %260 = vmatpush1.msra.mxu0 %v208
    %261 = vmatprep.subr.mxu0 0.0
    %262 = vmatpush2.msra.mxu0 0.0
    %263 = vmatprep.subr.mxu0 0.0
    %264 = vmatpush2.msra.mxu0 0.0
    %265 = vmatprep.subr.mxu0 0.0
    %266 = vmatpush2.msra.mxu0 0.0
    %267 = vmatprep.subr.mxu0 0.0
    %268 = vmatpush2.msra.mxu0 0.0
    %269 = vmatprep.subr.mxu0 0.0
    %270 = vmatpush2.msra.mxu0 0.0
    %271 = vmatprep.subr.mxu0 0.0
    %272 = vmatpush2.msra.mxu0 0.0
    %273 = vmatprep.subr.mxu0 0.0
    %274 = vmatpush2.msra.mxu0 0.0
    %275 = vmatprep.subr.mxu0 0.0
    %276 = vmatpush2.msra.mxu0 0.0
    %277 = vmatprep.subr.mxu0 0.0
    %278 = vmatpush2.msra.mxu0 0.0
    %279 = vmatprep.subr.mxu0 0.0
    %280 = vmatpush2.msra.mxu0 0.0
    %281 = vmatprep.subr.mxu0 0.0
    %282 = vmatpush2.msra.mxu0 0.0
    %283 = vmatprep.subr.mxu0 0.0
    %284 = vmatpush2.msra.mxu0 0.0
    %285 = vmatprep.subr.mxu0 0.0
    %286 = vmatpush2.msra.mxu0 0.0
    %287 = vmatprep.subr.mxu0 0.0
    %288 = vmatpush2.msra.mxu0 0.0
    %289 = vmatprep.subr.mxu0 0.0
    %290 = vmatpush2.msra.mxu0 0.0
    %291 = vmatprep.subr.mxu0 0.0
    %292 = vmatpush2.msra.mxu0 0.0
    %293 = vmatprep.mubr.f32.mxu0 0.0
    %294 = vmatmul.mubr.f32.gmra.mxu0 %v207
    %v295 = vpop.f32.mrf.mxu0
    %v296 = vadd.f32 %v228, %v295
    %v297 = vpop.f32.mrf.mxu0
    %298 = vdwg.mxu0
    %v299 = vmul.f32 %v296, 0.5
    %v300 = vtanh.pop %v299
    %v301 = vadd.f32 %v300, 1.0
    %v302 = vmul.f32 %v299, %v301
    %v303 = vld [vmem:[#allocation4 + $0xc8] sm:$0xff]
    %v304 = vld [vmem:[#allocation4 + $0xd0] sm:$0xff]
    %v305 = vld [vmem:[#allocation4 + $0xd8] sm:$0xff]
    %v306 = vld [vmem:[#allocation4 + $0xe0] sm:$0xff]
    %v307 = vld [vmem:[#allocation4 + $0xe8] sm:$0xff]
    %v308 = vld [vmem:[#allocation4 + $0xf0] sm:$0xff]
    %v309 = vld [vmem:[#allocation4 + $0xf8] sm:$0xff]
    %v310 = vld [vmem:[#allocation4 + $0x100] sm:$0xff]
    %v311 = vld [vmem:[#allocation4 + $0x108] sm:$0xff]
    %v312 = vld [vmem:[#allocation4 + $0x110] sm:$0xff]
    %v313 = vld [vmem:[#allocation4 + $0x118] sm:$0xff]
    %v314 = vld [vmem:[#allocation4 + $0x120] sm:$0xff]
    %v315 = vld [vmem:[#allocation4 + $0x128] sm:$0xff]
    %v316 = vld [vmem:[#allocation4 + $0x130] sm:$0xff]
    %v317 = vld [vmem:[#allocation4 + $0x138] sm:$0xff]
    %v318 = vld [vmem:[#allocation4 + $0x140] sm:$0xff]
    %v319 = vld [vmem:[#allocation4 + $0x150] sm:$0x1]
    %v320 = vlaneseq
    %v321 = vshrl.u32 %v320, 7
    %v322 = vsub.s32 0, %v321
    %v323 = vrot.slane %v319, %v322
    %324 = vmatprep.subr.mxu0 0.0
    %325 = vmatpush1.msra.mxu0 %v318
    %326 = vmatprep.subr.mxu0 0.0
    %327 = vmatpush1.msra.mxu0 %v317
    %328 = vmatprep.subr.mxu0 0.0
    %329 = vmatpush1.msra.mxu0 %v316
    %330 = vmatprep.subr.mxu0 0.0
    %331 = vmatpush1.msra.mxu0 %v315
    %332 = vmatprep.subr.mxu0 0.0
    %333 = vmatpush1.msra.mxu0 %v314
    %334 = vmatprep.subr.mxu0 0.0
    %335 = vmatpush1.msra.mxu0 %v313
    %336 = vmatprep.subr.mxu0 0.0
    %337 = vmatpush1.msra.mxu0 %v312
    %338 = vmatprep.subr.mxu0 0.0
    %339 = vmatpush1.msra.mxu0 %v311
    %340 = vmatprep.subr.mxu0 0.0
    %341 = vmatpush1.msra.mxu0 %v310
    %342 = vmatprep.subr.mxu0 0.0
    %343 = vmatpush1.msra.mxu0 %v309
    %344 = vmatprep.subr.mxu0 0.0
    %345 = vmatpush1.msra.mxu0 %v308
    %346 = vmatprep.subr.mxu0 0.0
    %347 = vmatpush1.msra.mxu0 %v307
    %348 = vmatprep.subr.mxu0 0.0
    %349 = vmatpush1.msra.mxu0 %v306
    %350 = vmatprep.subr.mxu0 0.0
    %351 = vmatpush1.msra.mxu0 %v305
    %352 = vmatprep.subr.mxu0 0.0
    %353 = vmatpush1.msra.mxu0 %v304
    %354 = vmatprep.subr.mxu0 0.0
    %355 = vmatpush1.msra.mxu0 %v303
    %356 = vmatprep.subr.mxu0 0.0
    %357 = vmatpush2.msra.mxu0 0.0
    %358 = vmatprep.subr.mxu0 0.0
    %359 = vmatpush2.msra.mxu0 0.0
    %360 = vmatprep.subr.mxu0 0.0
    %361 = vmatpush2.msra.mxu0 0.0
    %362 = vmatprep.subr.mxu0 0.0
    %363 = vmatpush2.msra.mxu0 0.0
    %364 = vmatprep.subr.mxu0 0.0
    %365 = vmatpush2.msra.mxu0 0.0
    %366 = vmatprep.subr.mxu0 0.0
    %367 = vmatpush2.msra.mxu0 0.0
    %368 = vmatprep.subr.mxu0 0.0
    %369 = vmatpush2.msra.mxu0 0.0
    %370 = vmatprep.subr.mxu0 0.0
    %371 = vmatpush2.msra.mxu0 0.0
    %372 = vmatprep.subr.mxu0 0.0
    %373 = vmatpush2.msra.mxu0 0.0
    %374 = vmatprep.subr.mxu0 0.0
    %375 = vmatpush2.msra.mxu0 0.0
    %376 = vmatprep.subr.mxu0 0.0
    %377 = vmatpush2.msra.mxu0 0.0
    %378 = vmatprep.subr.mxu0 0.0
    %379 = vmatpush2.msra.mxu0 0.0
    %380 = vmatprep.subr.mxu0 0.0
    %381 = vmatpush2.msra.mxu0 0.0
    %382 = vmatprep.subr.mxu0 0.0
    %383 = vmatpush2.msra.mxu0 0.0
    %384 = vmatprep.subr.mxu0 0.0
    %385 = vmatpush2.msra.mxu0 0.0
    %386 = vmatprep.subr.mxu0 0.0
    %387 = vmatpush2.msra.mxu0 0.0
    %388 = vmatprep.mubr.f32.mxu0 0.0
    %389 = vmatmul.mubr.f32.gmra.mxu0 %v302
    %v390 = vpop.f32.mrf.mxu0
    %v391 = vadd.f32 %v323, %v390
    %v392 = vpop.f32.mrf.mxu0
    %393 = vdwg.mxu0
    %vm394 = vcmask 31744
    %395 = vst.msk [vmem:[%s2] sm:$0xff] %vm394, %v391
    // Predicated region
    $region18: #{tpu_custom_call.1} parent=1 // pred_check
      _
    $region19: #{tpu_custom_call.1} parent=1 // pred_check_branch
      %397 = sbr.rel (0) target = $region21
    $region20: #{tpu_custom_call.1} parent=1 // pred_region
      _
    $region21: #{tpu_custom_call.1} parent=1 // pred_fallthru
      _
    // Predicated region
    $region22: #{tpu_custom_call.1} parent=1 // pred_check
      _
    $region23: #{tpu_custom_call.1} parent=1 // pred_check_branch
      %399 = sbr.rel (0) target = $region25
    $region24: #{tpu_custom_call.1} parent=1 // pred_region
      _
    $region25: #{tpu_custom_call.1} parent=1 // pred_fallthru
      _
    %400 = vsyncpa [#allocation3], 1
    %401 = vsyncpa [#allocation5], 1

</llo_original>
